<compile_context>
chip_gen: v6e
topology: v6e:2x2x1
jax: 0.10.0
libtpu: 0.0.40
codegen_flags: <defaults>
</compile_context>

<pallas_src>
import jax
import jax.numpy as jnp
import numpy as np
from jax.experimental import pallas as pl
from jax.experimental.pallas import tpu as pltpu

# ---------------- problem sizes (small, consistent with the module) ----------
B = 2          # batch
T = 64         # sequence length
CIN = 16       # input_dim
H = 32         # hidden_dim
K = 5          # conv kernel size
S = 2          # conv stride
L1 = (T - K) // S + 1    # 30  (after conv1)
L2 = (L1 - K) // S + 1   # 13  (after conv2)
PB = (L1 // 2) * B       # 30  rows per parity block of h1


def encoder_kernel(lhs1_ref, w1_ref, b1_ref, w2_ref, b2_ref, pool_ref, o_ref):
    """Single invocation, whole problem resident in VMEM.

    lhs1_ref: (B*L1, K*CIN) bf16  conv1 im2col LHS, rows ordered (parity, j, batch)
    w1_ref  : (K*CIN, H)    bf16  conv1 weights, tap-major flattened
    b1_ref  : (1, H)        f32
    w2_ref  : (K*H, H)      bf16  conv2 weights, tap-major flattened
    b2_ref  : (1, H)        f32
    pool_ref: (B, B*L2)     f32   per-batch averaging matrix
    o_ref   : (B, H)        f32   pooled features
    """
    # ---- conv1: one fat im2col matmul on the MXU (bf16 in, f32 accumulate).
    h1 = jnp.dot(lhs1_ref[...], w1_ref[...], preferred_element_type=jnp.float32)
    h1 = jnp.maximum(h1 + b1_ref[...], 0.0)      # ReLU; dropout = identity (eval)

    # ---- conv2 im2col built from the register-resident h1 (no VMEM scratch,
    # no strided loads).  h1 row p*PB + j*B + b holds conv1 output at time
    # t1 = 2*j + p for batch b.  Tap k of conv2 output row (t2, b) needs
    # t1 = 2*t2 + k, i.e. the contiguous row range starting at
    # (k&1)*PB + (k//2)*B with length B*L2.
    def tap(k):
        start = (k & 1) * PB + (k // 2) * B
        return h1[start:start + B * L2, :]

    lhs2 = jnp.concatenate([tap(k) for k in range(K)], axis=-1)    # (B*L2, K*H)
    h2 = jnp.dot(lhs2.astype(jnp.bfloat16), w2_ref[...],
                 preferred_element_type=jnp.float32)
    h2 = jnp.maximum(h2 + b2_ref[...], 0.0)      # (B*L2, H), rows ordered (t2, b)

    # ---- AdaptiveAvgPool1d(1) + squeeze: per-batch mean over time as a tiny
    # matmul, written as one lane-contiguous (B, H) store.
    o_ref[...] = jnp.dot(pool_ref[...], h2, preferred_element_type=jnp.float32)


def modality_encoder(x, w1, b1, w2, b2):
    """x: (B, T, CIN) f32 -> (B, H) f32.  Weights are tap-major: (K, C_in, C_out)."""
    # ---- layout plumbing in the wrapper (XLA side) ----
    # conv1 im2col, row order (parity, j, batch):
    taps = jnp.stack([x[:, k:k + S * L1:S, :] for k in range(K)], axis=2)  # (B, L1, K, CIN)
    cols = taps.reshape(B, L1, K * CIN)
    cols = cols.reshape(B, L1 // 2, 2, K * CIN).transpose(2, 1, 0, 3)      # (2, L1//2, B, KC)
    lhs1 = cols.reshape(B * L1, K * CIN).astype(jnp.bfloat16)

    w1f = w1.reshape(K * CIN, H).astype(jnp.bfloat16)
    w2f = w2.reshape(K * H, H).astype(jnp.bfloat16)

    # Averaging matrix: out[b] = (1/L2) * sum_{t2} h2[t2*B + b]
    r = jnp.arange(B * L2)
    pool = jnp.where((r[None, :] % B) == jnp.arange(B)[:, None],
                     1.0 / L2, 0.0).astype(jnp.float32)

    return pl.pallas_call(
        encoder_kernel,
        out_shape=jax.ShapeDtypeStruct((B, H), jnp.float32),
        in_specs=[pl.BlockSpec(memory_space=pltpu.MemorySpace.VMEM)] * 6,
        out_specs=pl.BlockSpec(memory_space=pltpu.MemorySpace.VMEM),
    )(lhs1, w1f, b1.astype(jnp.float32), w2f, b2.astype(jnp.float32), pool)


def reference_forward(x, w1, b1, w2, b2):
    """Pure-JAX f32 reference (matches the PyTorch forward in eval mode)."""
    def conv_relu(h, w, bias):
        Lout = (h.shape[1] - K) // S + 1
        acc = jnp.zeros((h.shape[0], Lout, w.shape[2]), jnp.float32)
        for k in range(K):
            acc = acc + jnp.einsum("blc,co->blo", h[:, k:k + S * Lout:S, :], w[k])
        return jnp.maximum(acc + bias, 0.0)

    h1 = conv_relu(x, w1, b1)
    h2 = conv_relu(h1, w2, b2)
    return jnp.mean(h2, axis=1)


if __name__ == "__main__":
    key = jax.random.PRNGKey(0)
    kx, k1, k2, k3, k4 = jax.random.split(key, 5)

    # Deterministic synthetic parameters (shapes follow nn.Conv1d(in, out, 5)):
    #   PyTorch conv weight is (C_out, C_in, K); here kept tap-major: (K, C_in, C_out).
    x = jax.random.normal(kx, (B, T, CIN), dtype=jnp.float32)
    w1 = jax.random.normal(k1, (K, CIN, H), dtype=jnp.float32) * (1.0 / np.sqrt(CIN * K))
    b1 = jax.random.normal(k2, (1, H), dtype=jnp.float32) * 0.1
    w2 = jax.random.normal(k3, (K, H, H), dtype=jnp.float32) * (1.0 / np.sqrt(H * K))
    b2 = jax.random.normal(k4, (1, H), dtype=jnp.float32) * 0.1

    out = modality_encoder(x, w1, b1, w2, b2)
    out = jax.block_until_ready(out)

    ref = reference_forward(x, w1, b1, w2, b2)
    assert out.shape == (B, H), out.shape
    assert np.allclose(np.asarray(out), np.asarray(ref), rtol=1e-2, atol=1e-2), (
        "mismatch vs reference")

    print("KERNEL_OK")
</pallas_src>

<mosaic_0001>
module attributes {stable_mosaic.version = 11 : i64} {
  func.func @encoder_kernel(%arg0: memref<60x80xbf16, #tpu.memory_space<vmem>>, %arg1: memref<80x32xbf16, #tpu.memory_space<vmem>>, %arg2: memref<1x32xf32, #tpu.memory_space<vmem>>, %arg3: memref<160x32xbf16, #tpu.memory_space<vmem>>, %arg4: memref<1x32xf32, #tpu.memory_space<vmem>>, %arg5: memref<2x26xf32, #tpu.memory_space<vmem>>, %arg6: memref<2x32xf32, #tpu.memory_space<vmem>>) attributes {dimension_semantics = [], scalar_prefetch = 0 : i64, scratch_operands = 0 : i64, tpu.core_type = #tpu.core_type<tc>} {
    %c0 = arith.constant 0 : index
    %c0_0 = arith.constant 0 : index
    %0 = vector.load %arg0[%c0, %c0_0] : memref<60x80xbf16, #tpu.memory_space<vmem>>, vector<60x80xbf16>
    %c0_1 = arith.constant 0 : index
    %c0_2 = arith.constant 0 : index
    %1 = vector.load %arg1[%c0_1, %c0_2] : memref<80x32xbf16, #tpu.memory_space<vmem>>, vector<80x32xbf16>
    %cst = arith.constant dense<0.000000e+00> : vector<60x32xf32>
    %2 = tpu.matmul %0, %1, %cst {dimension_numbers = #tpu.dot_dimension_numbers<[1], [0], [0], [1], [0, 0, 1, 1], [], []>} : vector<60x80xbf16>, vector<80x32xbf16>, vector<60x32xf32> -> vector<60x32xf32>
    %c0_3 = arith.constant 0 : index
    %c0_4 = arith.constant 0 : index
    %3 = vector.load %arg2[%c0_3, %c0_4] : memref<1x32xf32, #tpu.memory_space<vmem>>, vector<1x32xf32>
    %4 = vector.broadcast %3 : vector<1x32xf32> to vector<60x32xf32>
    %5 = arith.addf %2, %4 : vector<60x32xf32>
    %cst_5 = arith.constant 0.000000e+00 : f32
    %6 = vector.broadcast %cst_5 : f32 to vector<60x32xf32>
    %7 = arith.maximumf %5, %6 : vector<60x32xf32>
    %8 = vector.extract_strided_slice %7 {offsets = [0, 0], sizes = [26, 32], strides = [1, 1]} : vector<60x32xf32> to vector<26x32xf32>
    %9 = vector.extract_strided_slice %7 {offsets = [30, 0], sizes = [26, 32], strides = [1, 1]} : vector<60x32xf32> to vector<26x32xf32>
    %10 = vector.extract_strided_slice %7 {offsets = [2, 0], sizes = [26, 32], strides = [1, 1]} : vector<60x32xf32> to vector<26x32xf32>
    %11 = vector.extract_strided_slice %7 {offsets = [32, 0], sizes = [26, 32], strides = [1, 1]} : vector<60x32xf32> to vector<26x32xf32>
    %12 = vector.extract_strided_slice %7 {offsets = [4, 0], sizes = [26, 32], strides = [1, 1]} : vector<60x32xf32> to vector<26x32xf32>
    %13 = tpu.concatenate %8, %9, %10, %11, %12 in 1 : vector<26x32xf32>, vector<26x32xf32>, vector<26x32xf32>, vector<26x32xf32>, vector<26x32xf32> -> vector<26x160xf32>
    %14 = arith.truncf %13 : vector<26x160xf32> to vector<26x160xbf16>
    %c0_6 = arith.constant 0 : index
    %c0_7 = arith.constant 0 : index
    %15 = vector.load %arg3[%c0_6, %c0_7] : memref<160x32xbf16, #tpu.memory_space<vmem>>, vector<160x32xbf16>
    %cst_8 = arith.constant dense<0.000000e+00> : vector<26x32xf32>
    %16 = tpu.matmul %14, %15, %cst_8 {dimension_numbers = #tpu.dot_dimension_numbers<[1], [0], [0], [1], [0, 0, 1, 1], [], []>} : vector<26x160xbf16>, vector<160x32xbf16>, vector<26x32xf32> -> vector<26x32xf32>
    %c0_9 = arith.constant 0 : index
    %c0_10 = arith.constant 0 : index
    %17 = vector.load %arg4[%c0_9, %c0_10] : memref<1x32xf32, #tpu.memory_space<vmem>>, vector<1x32xf32>
    %18 = vector.broadcast %17 : vector<1x32xf32> to vector<26x32xf32>
    %19 = arith.addf %16, %18 : vector<26x32xf32>
    %cst_11 = arith.constant 0.000000e+00 : f32
    %20 = vector.broadcast %cst_11 : f32 to vector<26x32xf32>
    %21 = arith.maximumf %19, %20 : vector<26x32xf32>
    %c0_12 = arith.constant 0 : index
    %c0_13 = arith.constant 0 : index
    %22 = vector.load %arg5[%c0_12, %c0_13] : memref<2x26xf32, #tpu.memory_space<vmem>>, vector<2x26xf32>
    %cst_14 = arith.constant dense<0.000000e+00> : vector<2x32xf32>
    %23 = tpu.matmul %22, %21, %cst_14 {dimension_numbers = #tpu.dot_dimension_numbers<[1], [0], [0], [1], [0, 0, 1, 1], [], []>} : vector<2x26xf32>, vector<26x32xf32>, vector<2x32xf32> -> vector<2x32xf32>
    %c0_15 = arith.constant 0 : index
    %c0_16 = arith.constant 0 : index
    %24 = vector.load %arg6[%c0_15, %c0_16] : memref<2x32xf32, #tpu.memory_space<vmem>>, vector<2x32xf32>
    tpu.vector_store %arg6[%c0_15, %c0_16], %23 {strides = array<i32>} : memref<2x32xf32, #tpu.memory_space<vmem>>, vector<2x32xf32>,
    return
  }
}

</mosaic_0001>

<llo_original>
// kernel: tpu_custom_call.1
$region0: #{tpu_custom_call.1}
  #allocation0 [shape = 'u32[]', space=smem, size = 0x4, offset = 0x4, fixed_abs, tag = 'smem constant byte address 0x4 - core index']
  #allocation1 [shape = 'u32[144,128]{1,0:T(1,128)}', space=vmem, size = 0x12000, scoped, tag = 'internal scratch']
  %s0 = inlined_call_operand.vmem [shape: bf16[60,80], index: 0, kind: input, shape index: {}]
  %s1 = inlined_call_operand.vmem [shape: bf16[80,32], index: 1, kind: input, shape index: {}]
  %s2 = inlined_call_operand.vmem [shape: f32[1,32], index: 2, kind: input, shape index: {}]
  %s3 = inlined_call_operand.vmem [shape: bf16[160,32], index: 3, kind: input, shape index: {}]
  %s4 = inlined_call_operand.vmem [shape: f32[1,32], index: 4, kind: input, shape index: {}]
  %s5 = inlined_call_operand.vmem [shape: f32[2,26], index: 5, kind: input, shape index: {}]
  %s6 = inlined_call_operand.hbm [shape: f32[2,32], index: 6, kind: output, shape index: {}]
  %s7 = sld [smem:[#allocation0]]
  $region34: #{tpu_custom_call.1} parent=0
    _
  %s9 = ssub.s32 1, %s7
  %s10 = scalar_select 0, %s9, %s7
  $region1: #{tpu_custom_call.1} parent=0
    #allocation2 [shape = 'u8[1024]{0}', space=vmem, size = 0x400, scoped, tag = 'output window, operand 0, single buffered']
    #allocation3 [shape = 's32[1]{0}', space=sflag, size = 0x4, scoped, tag = 'scoped memory for tpu_custom_call.1']
    %11 = vsyncpa [#allocation3], 0
    // Predicated region
    $region2: #{tpu_custom_call.1} parent=1 // pred_check
      _
    $region3: #{tpu_custom_call.1} parent=1 // pred_check_branch
      %13 = sbr.rel (0) target = $region5
    $region4: #{tpu_custom_call.1} parent=1 // pred_region
      _
    $region5: #{tpu_custom_call.1} parent=1 // pred_fallthru
      _
    // Predicated region
    $region6: #{tpu_custom_call.1} parent=1 // pred_check
      _
    $region7: #{tpu_custom_call.1} parent=1 // pred_check_branch
      %15 = sbr.rel (0) target = $region9
    $region8: #{tpu_custom_call.1} parent=1 // pred_region
      _
    $region9: #{tpu_custom_call.1} parent=1 // pred_fallthru
      _
    // Predicated region
    $region10: #{tpu_custom_call.1} parent=1 // pred_check
      _
    $region11: #{tpu_custom_call.1} parent=1 // pred_check_branch
      %17 = sbr.rel (0) target = $region13
    $region12: #{tpu_custom_call.1} parent=1 // pred_region
      _
    $region13: #{tpu_custom_call.1} parent=1 // pred_fallthru
      _
    // Predicated region
    $region14: #{tpu_custom_call.1} parent=1 // pred_check
      _
    $region15: #{tpu_custom_call.1} parent=1 // pred_check_branch
      %19 = sbr.rel (0) target = $region17
    $region16: #{tpu_custom_call.1} parent=1 // pred_region
      _
    $region17: #{tpu_custom_call.1} parent=1 // pred_fallthru
      _
    // Predicated region
    $region18: #{tpu_custom_call.1} parent=1 // pred_check
      _
    $region19: #{tpu_custom_call.1} parent=1 // pred_check_branch
      %21 = sbr.rel (0) target = $region21
    $region20: #{tpu_custom_call.1} parent=1 // pred_region
      _
    $region21: #{tpu_custom_call.1} parent=1 // pred_fallthru
      _
    // Predicated region
    $region22: #{tpu_custom_call.1} parent=1 // pred_check
      _
    $region23: #{tpu_custom_call.1} parent=1 // pred_check_branch
      %23 = sbr.rel (0) target = $region25
    $region24: #{tpu_custom_call.1} parent=1 // pred_region
      _
    $region25: #{tpu_custom_call.1} parent=1 // pred_fallthru
      _
    %v25 = vld [vmem:[%s0] sm:$0xf]
    %v26 = vld [vmem:[%s0 + $0x4] sm:$0xf]
    %v27 = vld [vmem:[%s0 + $0x8] sm:$0xf]
    %v28 = vld [vmem:[%s0 + $0xc] sm:$0xf]
    %v29 = vld [vmem:[%s0 + $0x10] sm:$0xf]
    %v30 = vld [vmem:[%s0 + $0x14] sm:$0xf]
    %v31 = vld [vmem:[%s0 + $0x18] sm:$0xf]
    %v32 = vld [vmem:[%s0 + $0x1c] sm:$0x3]
    %v33 = vld [vmem:[%s1] sm:$0xf]
    %v34 = vld [vmem:[%s1 + $0x4] sm:$0xf]
    %v35 = vld [vmem:[%s1 + $0x8] sm:$0xf]
    %v36 = vld [vmem:[%s1 + $0xc] sm:$0xf]
    %v37 = vld [vmem:[%s1 + $0x10] sm:$0xf]
    %v38 = vld [vmem:[%s1 + $0x14] sm:$0xf]
    %v39 = vld [vmem:[%s1 + $0x18] sm:$0xf]
    %v40 = vld [vmem:[%s1 + $0x1c] sm:$0xf]
    %v41 = vld [vmem:[%s1 + $0x20] sm:$0xf]
    %v42 = vld [vmem:[%s1 + $0x24] sm:$0xf]
    %v43 = vld [vmem:[%s2] sm:$0x1]
    %v45 = vlaneseq
    %v46 = vshrl.u32 %v45, 7
    %v47 = vsub.s32 0, %v46
    %v48 = vrot.slane %v43, %v47
    %v58 = vunpack.c.l.b16 %v25
    %v59 = vunpack.c.l.b16 %v26
    %v60 = vunpack.c.l.b16 %v27
    %v61 = vunpack.c.l.b16 %v28
    %v62 = vunpack.c.l.b16 %v29
    %v63 = vunpack.c.l.b16 %v30
    %v64 = vunpack.c.l.b16 %v31
    %v65 = vunpack.c.l.b16 %v32
    %v66 = vpack.c.b16 %v59, %v58
    %v67 = vpack.c.b16 %v61, %v60
    %v68 = vpack.c.b16 %v63, %v62
    %v69 = vpack.c.b16 %v65, %v64
    %v80 = vunpack.c.l.b16 %v33
    %v81 = vunpack.c.l.b16 %v34
    %v82 = vunpack.c.l.b16 %v35
    %v83 = vunpack.c.l.b16 %v36
    %v84 = vunpack.c.l.b16 %v37
    %v85 = vunpack.c.l.b16 %v38
    %v86 = vunpack.c.l.b16 %v39
    %v87 = vunpack.c.l.b16 %v40
    %v88 = vunpack.c.l.b16 %v41
    %v89 = vunpack.c.l.b16 %v42
    %v90 = vpack.c.b16 %v81, %v80
    %v91 = vpack.c.b16 %v83, %v82
    %v92 = vpack.c.b16 %v85, %v84
    %v93 = vpack.c.b16 %v87, %v86
    %v94 = vpack.c.b16 %v89, %v88
    %vm100 = vcmask 654336
    %v102 = vsel %vm100, %v66, 0
    %v105 = vsel %vm100, %v67, 0
    %v108 = vsel %vm100, %v68, 0
    %v111 = vsel %vm100, %v69, 0
    %113 = vmatprep.subr.bf16.mxu0 0
    %114 = vmatpush1.bf16.msra.mxu0 0
    %115 = vmatprep.subr.bf16.mxu0 0
    %116 = vmatpush1.bf16.msra.mxu0 0
    %117 = vmatprep.subr.bf16.mxu0 0
    %118 = vmatpush1.bf16.msra.mxu0 0
    %119 = vmatprep.subr.bf16.mxu0 0
    %120 = vmatpush1.bf16.msra.mxu0 %v94
    %121 = vmatprep.subr.bf16.mxu0 0
    %122 = vmatpush1.bf16.msra.mxu0 %v93
    %123 = vmatprep.subr.bf16.mxu0 0
    %124 = vmatpush1.bf16.msra.mxu0 %v92
    %125 = vmatprep.subr.bf16.mxu0 0
    %126 = vmatpush1.bf16.msra.mxu0 %v91
    %127 = vmatprep.subr.bf16.mxu0 0
    %128 = vmatpush1.bf16.msra.mxu0 %v90
    %129 = vmatprep.subr.bf16.mxu0 0
    %130 = vmatpush2.bf16.msra.mxu0 0
    %131 = vmatprep.subr.bf16.mxu0 0
    %132 = vmatpush2.bf16.msra.mxu0 0
    %133 = vmatprep.subr.bf16.mxu0 0
    %134 = vmatpush2.bf16.msra.mxu0 0
    %135 = vmatprep.subr.bf16.mxu0 0
    %136 = vmatpush2.bf16.msra.mxu0 0
    %137 = vmatprep.subr.bf16.mxu0 0
    %138 = vmatpush2.bf16.msra.mxu0 0
    %139 = vmatprep.subr.bf16.mxu0 0
    %140 = vmatpush2.bf16.msra.mxu0 0
    %141 = vmatprep.subr.bf16.mxu0 0
    %142 = vmatpush2.bf16.msra.mxu0 0
    %143 = vmatprep.subr.bf16.mxu0 0
    %144 = vmatpush2.bf16.msra.mxu0 0
    %145 = vmatprep.mubr.bf16.mxu0 0
    %146 = vmatmul.mubr.bf16.gmra.mxu0 %v102
    %v147 = vpop.f32.mrf.mxu0
    %v148 = vadd.f32 %v48, %v147
    %v149 = vpop.f32.mrf.mxu0
    %v150 = vpop.f32.mrf.mxu0
    %v151 = vadd.f32 %v48, %v150
    %v152 = vpop.f32.mrf.mxu0
    %153 = vmatprep.mubr.bf16.mxu0 0
    %154 = vmatmul.mubr.bf16.gmra.mxu0 %v105
    %v155 = vpop.f32.mrf.mxu0
    %v156 = vadd.f32 %v48, %v155
    %v157 = vpop.f32.mrf.mxu0
    %v158 = vpop.f32.mrf.mxu0
    %v159 = vadd.f32 %v48, %v158
    %v160 = vpop.f32.mrf.mxu0
    %161 = vmatprep.mubr.bf16.mxu0 0
    %162 = vmatmul.mubr.bf16.gmra.mxu0 %v108
    %v163 = vpop.f32.mrf.mxu0
    %v164 = vadd.f32 %v48, %v163
    %v165 = vpop.f32.mrf.mxu0
    %v166 = vpop.f32.mrf.mxu0
    %v167 = vadd.f32 %v48, %v166
    %v168 = vpop.f32.mrf.mxu0
    %169 = vmatprep.mubr.bf16.mxu0 0
    %170 = vmatmul.mubr.bf16.gmra.mxu0 %v111
    %v171 = vpop.f32.mrf.mxu0
    %v172 = vadd.f32 %v48, %v171
    %v173 = vpop.f32.mrf.mxu0
    %v174 = vpop.f32.mrf.mxu0
    %v175 = vadd.f32 %v48, %v174
    %v176 = vpop.f32.mrf.mxu0
    %177 = vdwg.mxu0
    %v178 = vmax.f32 %v148, 0.0
    %v179 = vmax.f32 %v151, 0.0
    %v180 = vmax.f32 %v156, 0.0
    %v181 = vmax.f32 %v159, 0.0
    %v182 = vmax.f32 %v164, 0.0
    %v183 = vmax.f32 %v167, 0.0
    %v184 = vmax.f32 %v172, 0.0
    %v185 = vmax.f32 %v175, 0.0
    %vm190 = vcmask 1041408
    %v191 = vrot.slane %v181, 6
    %v192 = vrot.slane %v182, 6
    %v193 = vsel %vm190, %v191, %v192
    %v194 = vrot.slane %v183, 6
    %v195 = vsel %vm190, %v192, %v194
    %v196 = vrot.slane %v184, 6
    %v197 = vsel %vm190, %v194, %v196
    %198 = vrot.lane.b32.xlu0 %v193, 32
    %v199 = vpop.permute.xlu0 %198
    %200 = vrot.lane.b32.xlu0 %v195, 32
    %v201 = vpop.permute.xlu0 %200
    %202 = vrot.lane.b32.xlu0 %v197, 32
    %v203 = vpop.permute.xlu0 %202
    %204 = vrot.lane.b32.xlu0 %v196, 32
    %v205 = vpop.permute.xlu0 %204
    %vm213 = vcmask 1045504
    %v214 = vrot.slane %v178, 2
    %v215 = vrot.slane %v179, 2
    %v216 = vsel %vm213, %v214, %v215
    %v217 = vrot.slane %v180, 2
    %v218 = vsel %vm213, %v215, %v217
    %v219 = vrot.slane %v181, 2
    %v220 = vsel %vm213, %v217, %v219
    %221 = vrot.lane.b32.xlu0 %v216, 64
    %v222 = vpop.permute.xlu0 %221
    %223 = vrot.lane.b32.xlu0 %v218, 64
    %v224 = vpop.permute.xlu0 %223
    %225 = vrot.lane.b32.xlu0 %v220, 64
    %v226 = vpop.permute.xlu0 %225
    %227 = vrot.lane.b32.xlu0 %v219, 64
    %v228 = vpop.permute.xlu0 %227
    %234 = vrot.lane.b32.xlu0 %v182, 96
    %v235 = vpop.permute.xlu0 %234
    %236 = vrot.lane.b32.xlu0 %v183, 96
    %v237 = vpop.permute.xlu0 %236
    %238 = vrot.lane.b32.xlu0 %v184, 96
    %v239 = vpop.permute.xlu0 %238
    %240 = vrot.lane.b32.xlu0 %v185, 96
    %v241 = vpop.permute.xlu0 %240
    %vm246 = vcmask 1043456
    %v247 = vrot.slane %v178, 4
    %v248 = vrot.slane %v179, 4
    %v249 = vsel %vm246, %v247, %v248
    %v250 = vrot.slane %v180, 4
    %v251 = vsel %vm246, %v248, %v250
    %v252 = vrot.slane %v181, 4
    %v253 = vsel %vm246, %v250, %v252
    %vm258 = vcmask 261120
    %v259 = vsel %vm258, %v178, %v199
    %v260 = vsel %vm258, %v179, %v201
    %v261 = vsel %vm258, %v180, %v203
    %v262 = vsel %vm258, %v181, %v205
    %vm263 = vcmask 523264
    %v264 = vsel %vm263, %v259, %v222
    %v265 = vsel %vm263, %v260, %v224
    %v266 = vsel %vm263, %v261, %v226
    %v267 = vsel %vm263, %v262, %v228
    %vm268 = vcmask 785408
    %v269 = vsel %vm268, %v264, %v235
    %v270 = vsel %vm268, %v265, %v237
    %v271 = vsel %vm268, %v266, %v239
    %v272 = vsel %vm268, %v267, %v241
    %v273 = vpack.c.bf16 %v270, %v269
    %v274 = vpack.c.bf16 %v251, %v249
    %v275 = vpack.c.bf16 %v272, %v271
    %v276 = vpack.c.bf16 %v252, %v253
    %v277 = vld [vmem:[%s3] sm:$0xf]
    %v278 = vld [vmem:[%s3 + $0x4] sm:$0xf]
    %v279 = vld [vmem:[%s3 + $0x8] sm:$0xf]
    %v280 = vld [vmem:[%s3 + $0xc] sm:$0xf]
    %v281 = vld [vmem:[%s3 + $0x10] sm:$0xf]
    %v282 = vld [vmem:[%s3 + $0x14] sm:$0xf]
    %v283 = vld [vmem:[%s3 + $0x18] sm:$0xf]
    %v284 = vld [vmem:[%s3 + $0x1c] sm:$0xf]
    %v285 = vld [vmem:[%s3 + $0x20] sm:$0xf]
    %v286 = vld [vmem:[%s3 + $0x24] sm:$0xf]
    %v287 = vld [vmem:[%s3 + $0x28] sm:$0xf]
    %v288 = vld [vmem:[%s3 + $0x2c] sm:$0xf]
    %v289 = vld [vmem:[%s3 + $0x30] sm:$0xf]
    %v290 = vld [vmem:[%s3 + $0x34] sm:$0xf]
    %v291 = vld [vmem:[%s3 + $0x38] sm:$0xf]
    %v292 = vld [vmem:[%s3 + $0x3c] sm:$0xf]
    %v293 = vld [vmem:[%s3 + $0x40] sm:$0xf]
    %v294 = vld [vmem:[%s3 + $0x44] sm:$0xf]
    %v295 = vld [vmem:[%s3 + $0x48] sm:$0xf]
    %v296 = vld [vmem:[%s3 + $0x4c] sm:$0xf]
    %v297 = vld [vmem:[%s4] sm:$0x1]
    %v299 = vlaneseq
    %v300 = vshrl.u32 %v299, 7
    %v301 = vsub.s32 0, %v300
    %v302 = vrot.slane %v297, %v301
    %v324 = vunpack.c.l.b16 %v277
    %v325 = vunpack.c.l.b16 %v278
    %v326 = vunpack.c.l.b16 %v279
    %v327 = vunpack.c.l.b16 %v280
    %v328 = vunpack.c.l.b16 %v281
    %v329 = vunpack.c.l.b16 %v282
    %v330 = vunpack.c.l.b16 %v283
    %v331 = vunpack.c.l.b16 %v284
    %v332 = vunpack.c.l.b16 %v285
    %v333 = vunpack.c.l.b16 %v286
    %v334 = vunpack.c.l.b16 %v287
    %v335 = vunpack.c.l.b16 %v288
    %v336 = vunpack.c.l.b16 %v289
    %v337 = vunpack.c.l.b16 %v290
    %v338 = vunpack.c.l.b16 %v291
    %v339 = vunpack.c.l.b16 %v292
    %v340 = vunpack.c.l.b16 %v293
    %v341 = vunpack.c.l.b16 %v294
    %v342 = vunpack.c.l.b16 %v295
    %v343 = vunpack.c.l.b16 %v296
    %v344 = vpack.c.b16 %v325, %v324
    %v345 = vpack.c.b16 %v327, %v326
    %v346 = vpack.c.b16 %v329, %v328
    %v347 = vpack.c.b16 %v331, %v330
    %v348 = vpack.c.b16 %v333, %v332
    %v349 = vpack.c.b16 %v335, %v334
    %v350 = vpack.c.b16 %v337, %v336
    %v351 = vpack.c.b16 %v339, %v338
    %v352 = vpack.c.b16 %v341, %v340
    %v353 = vpack.c.b16 %v343, %v342
    %v365 = vsel %vm258, %v274, 0
    %v368 = vsel %vm258, %v276, 0
    %370 = vmatprep.subr.bf16.mxu0 0
    %371 = vmatpush1.bf16.msra.mxu0 %v351
    %372 = vmatprep.subr.bf16.mxu0 0
    %373 = vmatpush1.bf16.msra.mxu0 %v350
    %374 = vmatprep.subr.bf16.mxu0 0
    %375 = vmatpush1.bf16.msra.mxu0 %v349
    %376 = vmatprep.subr.bf16.mxu0 0
    %377 = vmatpush1.bf16.msra.mxu0 %v348
    %378 = vmatprep.subr.bf16.mxu0 0
    %379 = vmatpush1.bf16.msra.mxu0 %v347
    %380 = vmatprep.subr.bf16.mxu0 0
    %381 = vmatpush1.bf16.msra.mxu0 %v346
    %382 = vmatprep.subr.bf16.mxu0 0
    %383 = vmatpush1.bf16.msra.mxu0 %v345
    %384 = vmatprep.subr.bf16.mxu0 0
    %385 = vmatpush1.bf16.msra.mxu0 %v344
    %386 = vmatprep.subr.bf16.mxu0 0
    %387 = vmatpush2.bf16.msra.mxu0 0
    %388 = vmatprep.subr.bf16.mxu0 0
    %389 = vmatpush2.bf16.msra.mxu0 0
    %390 = vmatprep.subr.bf16.mxu0 0
    %391 = vmatpush2.bf16.msra.mxu0 0
    %392 = vmatprep.subr.bf16.mxu0 0
    %393 = vmatpush2.bf16.msra.mxu0 0
    %394 = vmatprep.subr.bf16.mxu0 0
    %395 = vmatpush2.bf16.msra.mxu0 0
    %396 = vmatprep.subr.bf16.mxu0 0
    %397 = vmatpush2.bf16.msra.mxu0 0
    %398 = vmatprep.subr.bf16.mxu0 0
    %399 = vmatpush2.bf16.msra.mxu0 %v353
    %400 = vmatprep.subr.bf16.mxu0 0
    %401 = vmatpush2.bf16.msra.mxu0 %v352
    %402 = vmatprep.mubr.bf16.mxu0 %v365
    %403 = vmatmul.mubr.bf16.gmra.mxu0 %v273
    %v404 = vpop.f32.mrf.mxu0
    %v405 = vadd.f32 %v302, %v404
    %v406 = vpop.f32.mrf.mxu0
    %v407 = vpop.f32.mrf.mxu0
    %v408 = vadd.f32 %v302, %v407
    %v409 = vpop.f32.mrf.mxu0
    %410 = vmatprep.mubr.bf16.mxu0 %v368
    %411 = vmatmul.mubr.bf16.gmra.mxu0 %v275
    %v412 = vpop.f32.mrf.mxu0
    %v413 = vadd.f32 %v302, %v412
    %v414 = vpop.f32.mrf.mxu0
    %v415 = vpop.f32.mrf.mxu0
    %v416 = vadd.f32 %v302, %v415
    %v417 = vpop.f32.mrf.mxu0
    %418 = vdwg.mxu0
    %v419 = vmax.f32 %v405, 0.0
    %v420 = vmax.f32 %v408, 0.0
    %v421 = vmax.f32 %v413, 0.0
    %v422 = vmax.f32 %v416, 0.0
    %v423 = vld [vmem:[%s5] sm:$0x3]
    %vm424 = vcmask 211968
    %v426 = vsel %vm424, %v423, 0
    %v429 = vsel %vm190, %v422, 0
    %431 = vmatprep.subr.mxu0 0.0
    %432 = vmatpush1.msra.mxu0 0.0
    %433 = vmatprep.subr.mxu0 0.0
    %434 = vmatpush1.msra.mxu0 0.0
    %435 = vmatprep.subr.mxu0 0.0
    %436 = vmatpush1.msra.mxu0 0.0
    %437 = vmatprep.subr.mxu0 0.0
    %438 = vmatpush1.msra.mxu0 0.0
    %439 = vmatprep.subr.mxu0 0.0
    %440 = vmatpush1.msra.mxu0 0.0
    %441 = vmatprep.subr.mxu0 0.0
    %442 = vmatpush1.msra.mxu0 0.0
    %443 = vmatprep.subr.mxu0 0.0
    %444 = vmatpush1.msra.mxu0 0.0
    %445 = vmatprep.subr.mxu0 0.0
    %446 = vmatpush1.msra.mxu0 0.0
    %447 = vmatprep.subr.mxu0 0.0
    %448 = vmatpush1.msra.mxu0 0.0
    %449 = vmatprep.subr.mxu0 0.0
    %450 = vmatpush1.msra.mxu0 0.0
    %451 = vmatprep.subr.mxu0 0.0
    %452 = vmatpush1.msra.mxu0 0.0
    %453 = vmatprep.subr.mxu0 0.0
    %454 = vmatpush1.msra.mxu0 0.0
    %455 = vmatprep.subr.mxu0 0.0
    %456 = vmatpush1.msra.mxu0 %v429
    %457 = vmatprep.subr.mxu0 0.0
    %458 = vmatpush1.msra.mxu0 %v421
    %459 = vmatprep.subr.mxu0 0.0
    %460 = vmatpush1.msra.mxu0 %v420
    %461 = vmatprep.subr.mxu0 0.0
    %462 = vmatpush1.msra.mxu0 %v419
    %463 = vmatprep.subr.mxu0 0.0
    %464 = vmatpush2.msra.mxu0 0.0
    %465 = vmatprep.subr.mxu0 0.0
    %466 = vmatpush2.msra.mxu0 0.0
    %467 = vmatprep.subr.mxu0 0.0
    %468 = vmatpush2.msra.mxu0 0.0
    %469 = vmatprep.subr.mxu0 0.0
    %470 = vmatpush2.msra.mxu0 0.0
    %471 = vmatprep.subr.mxu0 0.0
    %472 = vmatpush2.msra.mxu0 0.0
    %473 = vmatprep.subr.mxu0 0.0
    %474 = vmatpush2.msra.mxu0 0.0
    %475 = vmatprep.subr.mxu0 0.0
    %476 = vmatpush2.msra.mxu0 0.0
    %477 = vmatprep.subr.mxu0 0.0
    %478 = vmatpush2.msra.mxu0 0.0
    %479 = vmatprep.subr.mxu0 0.0
    %480 = vmatpush2.msra.mxu0 0.0
    %481 = vmatprep.subr.mxu0 0.0
    %482 = vmatpush2.msra.mxu0 0.0
    %483 = vmatprep.subr.mxu0 0.0
    %484 = vmatpush2.msra.mxu0 0.0
    %485 = vmatprep.subr.mxu0 0.0
    %486 = vmatpush2.msra.mxu0 0.0
    %487 = vmatprep.subr.mxu0 0.0
    %488 = vmatpush2.msra.mxu0 0.0
    %489 = vmatprep.subr.mxu0 0.0
    %490 = vmatpush2.msra.mxu0 0.0
    %491 = vmatprep.subr.mxu0 0.0
    %492 = vmatpush2.msra.mxu0 0.0
    %493 = vmatprep.subr.mxu0 0.0
    %494 = vmatpush2.msra.mxu0 0.0
    %495 = vmatprep.mubr.f32.mxu0 0.0
    %496 = vmatmul.mubr.f32.gmra.mxu0 %v426
    %v497 = vpop.f32.mrf.mxu0
    %v498 = vadd.f32 0.0, %v497
    %v499 = vpop.f32.mrf.mxu0
    %500 = vdwg.mxu0
    %vm501 = vcmask 254976
    %502 = vst.msk [vmem:[#allocation2] sm:$0x3] %vm501, %v498
    // Predicated region
    $region26: #{tpu_custom_call.1} parent=1 // pred_check
      _
    $region27: #{tpu_custom_call.1} parent=1 // pred_check_branch
      %504 = sbr.rel (0) target = $region29
    $region28: #{tpu_custom_call.1} parent=1 // pred_region
      %s506 = ssub.s32 32, 32
      %507 = vsyncadd [#allocation3], %s506
      %s509 = sshll.u32 [#allocation2], 4
      %s510 = int_to_ptr.vmem [resolvable:$true] %s509
      %512 = dma.vmem_to_hbm [thread:$0]  %s510, 32, %s6, [#allocation3]
    $region29: #{tpu_custom_call.1} parent=1 // pred_fallthru
      _
    // Predicated region
    $region30: #{tpu_custom_call.1} parent=1 // pred_check
      _
    $region31: #{tpu_custom_call.1} parent=1 // pred_check_branch
      %514 = sbr.rel (0) target = $region33
    $region32: #{tpu_custom_call.1} parent=1 // pred_region
      %515 = dma.done [#allocation3], 32
    $region33: #{tpu_custom_call.1} parent=1 // pred_fallthru
      _
    %516 = vsyncpa [#allocation3], 1

</llo_original>
